<compile_context>
chip_gen: v7x
topology: tpu7x:2x2x1
jax: 0.10.0
libtpu: 0.0.40
codegen_flags: <defaults>
</compile_context>

<pallas_src>
import functools
import math

import jax
import jax.numpy as jnp
from jax import lax
from jax.experimental import pallas as pl
from jax.experimental.pallas import tpu as pltpu


def _fit(dim, target, *, align=256):
    """Largest tile <= target dividing dim, preferring `align` (256) multiples
    for v6e/v7x MXUs, then 128-multiples, then 8-multiples, then any divisor."""
    if dim <= target:
        return dim
    for step in (align, 128, 8, 1):
        if step > target:
            continue
        t = (target // step) * step
        while t >= step:
            if dim % t == 0:
                return t
            t -= step
    return dim


# ---------------------------------------------------------------------------
# Tiled projection matmul:  out = x @ wT   (bias-free: to_q / to_k / to_v)
# ---------------------------------------------------------------------------
def _matmul_kernel(x_ref, w_ref, o_ref, acc_ref):
    @pl.when(pl.program_id(2) == 0)
    def _():
        acc_ref[...] = jnp.zeros_like(acc_ref)

    acc_ref[...] += jnp.dot(x_ref[...], w_ref[...],
                            preferred_element_type=jnp.float32)

    @pl.when(pl.program_id(2) == pl.num_programs(2) - 1)
    def _():
        o_ref[...] = acc_ref[...].astype(o_ref.dtype)


def pallas_matmul(x, wT, *, tm=256, tn=512, tk=512):
    """x: (M, K), wT: (K, N) -> (M, N) in x.dtype, f32 accumulation."""
    M, K = x.shape
    K2, N = wT.shape
    assert K == K2
    tm_, tn_, tk_ = _fit(M, tm), _fit(N, tn), _fit(K, tk)
    grid = (M // tm_, N // tn_, K // tk_)
    return pl.pallas_call(
        _matmul_kernel,
        out_shape=jax.ShapeDtypeStruct((M, N), x.dtype),
        grid_spec=pltpu.PrefetchScalarGridSpec(
            num_scalar_prefetch=0,
            grid=grid,
            in_specs=[
                pl.BlockSpec((tm_, tk_), lambda i, j, k: (i, k)),
                pl.BlockSpec((tk_, tn_), lambda i, j, k: (k, j)),
            ],
            out_specs=pl.BlockSpec((tm_, tn_), lambda i, j, k: (i, j)),
            scratch_shapes=[pltpu.VMEM((tm_, tn_), jnp.float32)],
        ),
        compiler_params=pltpu.CompilerParams(
            dimension_semantics=("parallel", "parallel", "arbitrary")),
    )(x, wT)


# ---------------------------------------------------------------------------
# Fused online-softmax attention + output projection kernel.
# Grid = (batch, q-tile, kv-tile); kv-tile is the "arbitrary" reduction axis.
# Heads stay merged (lane-dense) and are processed as static lane slices.
# ---------------------------------------------------------------------------
def _attn_kernel(q_ref, kv_ref, wo_ref, bo_ref, o_ref,
                 m_sc, l_sc, acc_sc, *, heads, dim_head, pv_dtype):
    inner = heads * dim_head
    kj = pl.program_id(2)

    @pl.when(kj == 0)
    def _():
        m_sc[...] = jnp.full_like(m_sc, -jnp.inf)
        l_sc[...] = jnp.zeros_like(l_sc)
        acc_sc[...] = jnp.zeros_like(acc_sc)

    for h in range(heads):                            # static unrolled (small)
        sl = slice(h * dim_head, (h + 1) * dim_head)
        qh = q_ref[:, sl]                             # (tq, dh); scale folded into wq
        kh = kv_ref[:, sl]                            # (tkv, dh)
        vh = kv_ref[:, inner + h * dim_head: inner + (h + 1) * dim_head]

        # q @ k^T without an explicit transpose: contract the last dims.
        s = lax.dot_general(qh, kh, (((1,), (1,)), ((), ())),
                            preferred_element_type=jnp.float32)   # (tq, tkv)

        m_prev = m_sc[h]                                          # (tq, 1)
        m_new = jnp.maximum(m_prev, jnp.max(s, axis=-1, keepdims=True))
        alpha = jnp.exp(m_prev - m_new)
        p = jnp.exp(s - m_new)                    # unnormalized (1/l deferred)
        l_sc[h] = alpha * l_sc[h] + jnp.sum(p, axis=-1, keepdims=True)
        m_sc[h] = m_new

        pv = jnp.dot(p.astype(pv_dtype), vh.astype(pv_dtype),
                     preferred_element_type=jnp.float32)          # (tq, dh)
        acc_sc[:, sl] = alpha * acc_sc[:, sl] + pv

    @pl.when(kj == pl.num_programs(2) - 1)
    def _():
        # Deferred normalization on the (tq, inner) accumulator, then ONE
        # output-projection matmul with the full `inner` contraction dim.
        for h in range(heads):
            sl = slice(h * dim_head, (h + 1) * dim_head)
            inv_h = pl.reciprocal(l_sc[h], approx=False)          # exact, (tq,1)
            acc_sc[:, sl] = acc_sc[:, sl] * inv_h
        y = jnp.dot(acc_sc[...].astype(wo_ref.dtype), wo_ref[...],
                    preferred_element_type=jnp.float32)           # (tq, qdim)
        o_ref[...] = (y + bo_ref[...]).astype(o_ref.dtype)


def _attn_vmem_limit(tq, tkv, inner, qdim, heads, itemsize):
    """Explicit scoped-VMEM budget: double-buffered blocks + scratch + slack."""
    b = 0
    b += 2 * tq * inner * itemsize            # Q block (x2 buffers)
    b += 2 * tkv * (2 * inner) * itemsize     # merged K/V block
    b += 2 * inner * qdim * itemsize          # wo
    b += 2 * qdim * itemsize                  # bias
    b += 2 * tq * qdim * itemsize             # out block
    b += 2 * heads * tq * 4                   # m, l scratch
    b += tq * inner * 4                       # acc scratch
    b += 2 * tq * tkv * 4                     # score/exp intermediates headroom
    budget = int(b * 1.5)                     # ~25%+ pipeline headroom
    return min(64 << 20, max(budget, 32 << 20))   # valid on v7x's 64 MiB/TC


def pallas_attention_proj(q_arr, kv_arr, woT, bo2d, *, b, nq, nk, heads,
                          dim_head, q_col, pv_dtype=jnp.bfloat16):
    """q_arr: (b*nq, W_q) holding Q at column-block q_col (units of `inner`);
    kv_arr: (b*nk, W_kv) holding K|V in its first 2*inner columns.
    Returns to_out(attention(q, k, v)) of shape (b, nq, query_dim)."""
    inner = heads * dim_head
    qdim = woT.shape[1]
    assert woT.shape[0] == inner
    # TODO(synk): pad (and mask pad keys in the online softmax) for shapes that
    # violate the (8, 128) block constraints below.
    assert inner % 128 == 0, "heads*dim_head must be a multiple of 128 lanes"

    tq = _fit(nq, 256)
    if b * (nq // tq) < 2 and nq >= 16 and nq % 2 == 0:
        tq = _fit(nq, nq // 2)                # keep both v7x TensorCores busy
    tkv = _fit(nk, 512)
    assert tq % 8 == 0 or tq == b * nq, "q tile must be a multiple of 8 rows"
    assert tkv % 8 == 0 or tkv == b * nk, "kv tile must be a multiple of 8 rows"
    nqt, nkt = nq // tq, nk // tkv

    kernel = functools.partial(_attn_kernel, heads=heads, dim_head=dim_head,
                               pv_dtype=pv_dtype)
    vmem_limit = _attn_vmem_limit(tq, tkv, inner, qdim, heads,
                                  jnp.dtype(q_arr.dtype).itemsize)

    out = pl.pallas_call(
        kernel,
        out_shape=jax.ShapeDtypeStruct((b * nq, qdim), q_arr.dtype),
        grid_spec=pltpu.PrefetchScalarGridSpec(
            num_scalar_prefetch=0,
            grid=(b, nqt, nkt),
            in_specs=[
                # Q tile (column block in units of `inner`).
                pl.BlockSpec((tq, inner), lambda i, j, k: (i * nqt + j, q_col)),
                # Merged K|V tile (column block in units of 2*inner).
                pl.BlockSpec((tkv, 2 * inner), lambda i, j, k: (i * nkt + k, 0)),
                pl.BlockSpec((inner, qdim), lambda i, j, k: (0, 0)),
                pl.BlockSpec((1, qdim), lambda i, j, k: (0, 0)),
            ],
            out_specs=pl.BlockSpec((tq, qdim), lambda i, j, k: (i * nqt + j, 0)),
            scratch_shapes=[
                pltpu.VMEM((heads, tq, 1), jnp.float32),   # running max
                pltpu.VMEM((heads, tq, 1), jnp.float32),   # running sum
                pltpu.VMEM((tq, inner), jnp.float32),      # head-concat acc
            ],
        ),
        compiler_params=pltpu.CompilerParams(
            dimension_semantics=("parallel", "parallel", "arbitrary"),
            vmem_limit_bytes=vmem_limit),
    )(q_arr, kv_arr, woT, bo2d)
    return out.reshape(b, nq, qdim)


# ---------------------------------------------------------------------------
# Parameter preparation (done once, outside the forward hot path)
# ---------------------------------------------------------------------------
def prepare_params(params, *, heads, dim_head, self_attention):
    """Pre-concatenate / pre-transpose weights and fold the softmax scale into
    the Q projection so no per-call weight copies or in-kernel scaling occur."""
    scale = 1.0 / math.sqrt(dim_head)
    wq_s = params["wq"] * scale
    prep = {
        "mode": "self" if self_attention else "cross",
        "woT": params["wo"].T,                            # (inner, query_dim)
        "bo2d": params["bo"].reshape(1, -1),              # (1, query_dim)
    }
    if self_attention:
        # Order [K, V, Q] so K|V are the leading 2*inner columns (merged KV
        # block) and Q is the trailing `inner` column block.
        prep["w_kvq_T"] = jnp.concatenate(
            [params["wk"], params["wv"], wq_s], axis=0).T  # (qdim, 3*inner)
    else:
        prep["wq_sT"] = wq_s.T                             # (qdim, inner)
        prep["w_kv_T"] = jnp.concatenate(
            [params["wk"], params["wv"]], axis=0).T        # (cdim, 2*inner)
    return prep


# ---------------------------------------------------------------------------
# Module forward (dropout p=0.0 -> identity)
# ---------------------------------------------------------------------------
def memory_efficient_cross_attention(x, context, prepared, *, heads, dim_head):
    b, nq, qdim = x.shape
    if prepared["mode"] == "self":
        assert context is None, "prepared for self-attention (context=None)"
        qkv = pallas_matmul(x.reshape(b * nq, qdim), prepared["w_kvq_T"])
        return pallas_attention_proj(
            qkv, qkv, prepared["woT"], prepared["bo2d"], b=b, nq=nq, nk=nq,
            heads=heads, dim_head=dim_head, q_col=2)

    ctx = context if context is not None else x
    _, nk, cdim = ctx.shape
    q2 = pallas_matmul(x.reshape(b * nq, qdim), prepared["wq_sT"])
    kv = pallas_matmul(ctx.reshape(b * nk, cdim), prepared["w_kv_T"])
    return pallas_attention_proj(
        q2, kv, prepared["woT"], prepared["bo2d"], b=b, nq=nq, nk=nk,
        heads=heads, dim_head=dim_head, q_col=0)


# ---------------------------------------------------------------------------
# Deterministic parameter init (PyTorch nn.Linear-style uniform bounds)
# ---------------------------------------------------------------------------
def init_params(key, query_dim, context_dim, heads, dim_head):
    inner = heads * dim_head
    ks = jax.random.split(key, 5)

    def uinit(k, shape, fan_in):
        bound = 1.0 / math.sqrt(fan_in)
        return jax.random.uniform(k, shape, jnp.float32, -bound, bound)

    return {
        "wq": uinit(ks[0], (inner, query_dim), query_dim),
        "wk": uinit(ks[1], (inner, context_dim), context_dim),
        "wv": uinit(ks[2], (inner, context_dim), context_dim),
        "wo": uinit(ks[3], (query_dim, inner), inner),
        "bo": uinit(ks[4], (query_dim,), inner),
    }


# ---------------------------------------------------------------------------
# Pure-JAX reference (same math) for a sanity check
# ---------------------------------------------------------------------------
def reference(x, context, params, *, heads, dim_head):
    b, nq, _ = x.shape
    ctx = x if context is None else context
    nk = ctx.shape[1]
    inner = heads * dim_head
    q = x @ params["wq"].T
    k = ctx @ params["wk"].T
    v = ctx @ params["wv"].T
    sh = lambda t, n: t.reshape(b, n, heads, dim_head).transpose(0, 2, 1, 3)
    qh, kh, vh = sh(q, nq), sh(k, nk), sh(v, nk)
    s = jnp.einsum("bhqd,bhkd->bhqk", qh, kh) / math.sqrt(dim_head)
    p = jax.nn.softmax(s, axis=-1)
    o = jnp.einsum("bhqk,bhkd->bhqd", p, vh)
    o = o.transpose(0, 2, 1, 3).reshape(b, nq, inner)
    return o @ params["wo"].T + params["bo"]


if __name__ == "__main__":
    query_dim, context_dim = 64, 48
    heads, dim_head = 4, 32          # inner = 128 -> lane-dense merged-head blocks
    b, nq, nk = 2, 16, 8

    key = jax.random.PRNGKey(0)
    kx, kc, kp, kp2 = jax.random.split(key, 4)
    x = jax.random.normal(kx, (b, nq, query_dim), jnp.float32)
    context = jax.random.normal(kc, (b, nk, context_dim), jnp.float32)

    # Cross-attention path (Q projection + fused K/V projection).
    params = init_params(kp, query_dim, context_dim, heads, dim_head)
    prep_cross = prepare_params(params, heads=heads, dim_head=dim_head,
                                self_attention=False)
    out = memory_efficient_cross_attention(x, context, prep_cross,
                                           heads=heads, dim_head=dim_head)
    out = jax.block_until_ready(out)
    ref = reference(x, context, params, heads=heads, dim_head=dim_head)
    assert out.shape == (b, nq, query_dim)
    # Tolerance reflects the bf16 probability/value operands in the PV matmul
    # (the softmax reciprocal is now exact).
    assert jnp.allclose(out, ref, atol=2e-2, rtol=2e-2), "cross-attention mismatch"

    # Self-attention path (context=None) exercises the fused K/V/Q projection.
    params_sa = init_params(kp2, query_dim, query_dim, heads, dim_head)
    prep_self = prepare_params(params_sa, heads=heads, dim_head=dim_head,
                               self_attention=True)
    out_sa = memory_efficient_cross_attention(x, None, prep_self,
                                              heads=heads, dim_head=dim_head)
    out_sa = jax.block_until_ready(out_sa)
    ref_sa = reference(x, None, params_sa, heads=heads, dim_head=dim_head)
    assert jnp.allclose(out_sa, ref_sa, atol=2e-2, rtol=2e-2), "self-attention mismatch"

    print("KERNEL_OK")
</pallas_src>

<mosaic_0001>
module attributes {stable_mosaic.version = 11 : i64} {
  func.func @_matmul_kernel(%arg0: i32, %arg1: i32, %arg2: i32, %arg3: memref<32x64xf32, #tpu.memory_space<vmem>>, %arg4: memref<64x128xf32, #tpu.memory_space<vmem>>, %arg5: memref<32x128xf32, #tpu.memory_space<vmem>>, %arg6: memref<32x128xf32, #tpu.memory_space<vmem>>) attributes {dimension_semantics = [#tpu.dimension_semantics<parallel>, #tpu.dimension_semantics<parallel>, #tpu.dimension_semantics<arbitrary>], iteration_bounds = array<i64: 1, 1, 1>, scalar_prefetch = 0 : i64, scratch_operands = 1 : i64, tpu.core_type = #tpu.core_type<tc>, window_params = [{transform_indices = @transform_0, window_bounds = array<i64: 32, 64>}, {transform_indices = @transform_1, window_bounds = array<i64: 64, 128>}, {transform_indices = @transform_2, window_bounds = array<i64: 32, 128>}]} {
    %c0_i32 = arith.constant 0 : i32
    %0 = arith.cmpi eq, %arg2, %c0_i32 : i32
    %1 = arith.extui %0 : i1 to i32
    %c0_i32_0 = arith.constant 0 : i32
    %2 = arith.cmpi ne, %1, %c0_i32_0 : i32
    scf.if %2 {
      %cst_10 = arith.constant 0.000000e+00 : f32
      %12 = vector.broadcast %cst_10 : f32 to vector<32x128xf32>
      %c0_11 = arith.constant 0 : index
      %c0_12 = arith.constant 0 : index
      %13 = vector.load %arg6[%c0_11, %c0_12] : memref<32x128xf32, #tpu.memory_space<vmem>>, vector<32x128xf32>
      tpu.vector_store %arg6[%c0_11, %c0_12], %12 {strides = array<i32>} : memref<32x128xf32, #tpu.memory_space<vmem>>, vector<32x128xf32>,
    } else {
    }
    %c0 = arith.constant 0 : index
    %c0_1 = arith.constant 0 : index
    %3 = vector.load %arg6[%c0, %c0_1] : memref<32x128xf32, #tpu.memory_space<vmem>>, vector<32x128xf32>
    %c0_2 = arith.constant 0 : index
    %c0_3 = arith.constant 0 : index
    %4 = vector.load %arg3[%c0_2, %c0_3] : memref<32x64xf32, #tpu.memory_space<vmem>>, vector<32x64xf32>
    %c0_4 = arith.constant 0 : index
    %c0_5 = arith.constant 0 : index
    %5 = vector.load %arg4[%c0_4, %c0_5] : memref<64x128xf32, #tpu.memory_space<vmem>>, vector<64x128xf32>
    %cst = arith.constant dense<0.000000e+00> : vector<32x128xf32>
    %6 = tpu.matmul %4, %5, %cst {dimension_numbers = #tpu.dot_dimension_numbers<[1], [0], [0], [1], [0, 0, 1, 1], [], []>} : vector<32x64xf32>, vector<64x128xf32>, vector<32x128xf32> -> vector<32x128xf32>
    %7 = arith.addf %3, %6 : vector<32x128xf32>
    %c0_6 = arith.constant 0 : index
    %c0_7 = arith.constant 0 : index
    %8 = vector.load %arg6[%c0_6, %c0_7] : memref<32x128xf32, #tpu.memory_space<vmem>>, vector<32x128xf32>
    tpu.vector_store %arg6[%c0_6, %c0_7], %7 {strides = array<i32>} : memref<32x128xf32, #tpu.memory_space<vmem>>, vector<32x128xf32>,
    %c0_i32_8 = arith.constant 0 : i32
    %9 = arith.cmpi eq, %arg2, %c0_i32_8 : i32
    %10 = arith.extui %9 : i1 to i32
    %c0_i32_9 = arith.constant 0 : i32
    %11 = arith.cmpi ne, %10, %c0_i32_9 : i32
    scf.if %11 {
      %c0_10 = arith.constant 0 : index
      %c0_11 = arith.constant 0 : index
      %12 = vector.load %arg6[%c0_10, %c0_11] : memref<32x128xf32, #tpu.memory_space<vmem>>, vector<32x128xf32>
      %c0_12 = arith.constant 0 : index
      %c0_13 = arith.constant 0 : index
      %13 = vector.load %arg5[%c0_12, %c0_13] : memref<32x128xf32, #tpu.memory_space<vmem>>, vector<32x128xf32>
      tpu.vector_store %arg5[%c0_12, %c0_13], %12 {strides = array<i32>} : memref<32x128xf32, #tpu.memory_space<vmem>>, vector<32x128xf32>,
    } else {
    }
    return
  }
  func.func @transform_0(%arg0: i32, %arg1: i32, %arg2: i32) -> (i32, i32) {
    %c0_i32 = arith.constant 0 : i32
    return %arg0, %arg2 : i32, i32
  }
  func.func @transform_1(%arg0: i32, %arg1: i32, %arg2: i32) -> (i32, i32) {
    %c0_i32 = arith.constant 0 : i32
    return %arg2, %arg1 : i32, i32
  }
  func.func @transform_2(%arg0: i32, %arg1: i32, %arg2: i32) -> (i32, i32) {
    %c0_i32 = arith.constant 0 : i32
    return %arg0, %arg1 : i32, i32
  }
}

</mosaic_0001>

<llo_original>
// kernel: tpu_custom_call.1
$region0: #{tpu_custom_call.1}
  #allocation0 [shape = 'u32[]', space=smem, size = 0x4, offset = 0x4, fixed_abs, tag = 'smem constant byte address 0x4 - core index']
  #allocation1 [shape = 'u32[144,128]{1,0:T(1,128)}', space=vmem, size = 0x12000, scoped, tag = 'internal scratch']
  #allocation2 [shape = 'f32[32,128]{1,0:T(8,128)}', space=vmem, size = 0x4000, scoped, tag = 'scratch operand']
  %s0 = inlined_call_operand.hbm [shape: f32[32,64], index: 0, kind: input, shape index: {}]
  %s1 = inlined_call_operand.hbm [shape: f32[64,128], index: 1, kind: input, shape index: {}]
  %s2 = inlined_call_operand.hbm [shape: f32[32,128], index: 2, kind: output, shape index: {}]
  %s3 = sld [smem:[#allocation0]]
  $region34: #{tpu_custom_call.1} parent=0
    _
  %s5 = ssub.s32 1, %s3
  %s6 = scalar_select 0, %s5, %s3
  $region1: #{tpu_custom_call.1} parent=0
    #allocation3 [shape = 'u8[16384]{0}', space=vmem, size = 0x4000, scoped, tag = 'input window, operand 0, single buffered']
    #allocation4 [shape = 's32[1]{0}', space=sflag, size = 0x4, scoped, tag = 'scoped memory for tpu_custom_call.1']
    #allocation5 [shape = 's32[1]{0}', space=sflag, size = 0x4, scoped, tag = 'scoped memory for tpu_custom_call.1']
    #allocation6 [shape = 'u8[32768]{0}', space=vmem, size = 0x8000, scoped, tag = 'input window, operand 1, single buffered']
    #allocation7 [shape = 's32[1]{0}', space=sflag, size = 0x4, scoped, tag = 'scoped memory for tpu_custom_call.1']
    #allocation8 [shape = 'u8[16384]{0}', space=vmem, size = 0x4000, scoped, tag = 'output window, operand 0, single buffered']
    %7 = vsyncpa [#allocation4], 0
    %8 = vsyncpa [#allocation7], 0
    %9 = vsyncpa [#allocation5], 0
    // Predicated region
    $region2: #{tpu_custom_call.1} parent=1 // pred_check
      _
    $region3: #{tpu_custom_call.1} parent=1 // pred_check_branch
      %11 = sbr.rel (0) target = $region5
    $region4: #{tpu_custom_call.1} parent=1 // pred_region
      %s13 = ssub.s32 512, 512
      %14 = vsyncadd [#allocation4], %s13
      %s15 = sshll.u32 [#allocation3], 4
      %s16 = int_to_ptr.vmem [resolvable:$true] %s15
      %21 = dma.hbm_to_vmem [thread:$0]  %s0, 512, %s16, [#allocation4], 128, 128, 8
    $region5: #{tpu_custom_call.1} parent=1 // pred_fallthru
      _
    // Predicated region
    $region6: #{tpu_custom_call.1} parent=1 // pred_check
      _
    $region7: #{tpu_custom_call.1} parent=1 // pred_check_branch
      %23 = sbr.rel (0) target = $region9
    $region8: #{tpu_custom_call.1} parent=1 // pred_region
      %s25 = ssub.s32 1024, 1024
      %26 = vsyncadd [#allocation7], %s25
      %s27 = sshll.u32 [#allocation6], 4
      %s28 = int_to_ptr.vmem [resolvable:$true] %s27
      %33 = dma.hbm_to_vmem [thread:$0]  %s1, 1024, %s28, [#allocation7], 128, 128, 8
    $region9: #{tpu_custom_call.1} parent=1 // pred_fallthru
      _
    // Predicated region
    $region10: #{tpu_custom_call.1} parent=1 // pred_check
      _
    $region11: #{tpu_custom_call.1} parent=1 // pred_check_branch
      %35 = sbr.rel (0) target = $region13
    $region12: #{tpu_custom_call.1} parent=1 // pred_region
      %36 = dma.done [#allocation4], 512
    $region13: #{tpu_custom_call.1} parent=1 // pred_fallthru
      _
    // Predicated region
    $region14: #{tpu_custom_call.1} parent=1 // pred_check
      _
    $region15: #{tpu_custom_call.1} parent=1 // pred_check_branch
      %38 = sbr.rel (0) target = $region17
    $region16: #{tpu_custom_call.1} parent=1 // pred_region
      %39 = dma.done [#allocation7], 1024
    $region17: #{tpu_custom_call.1} parent=1 // pred_fallthru
      _
    %p40 = scmp.eq.s32.totalorder 0, 0
    // Predicated region
    $region18: #{tpu_custom_call.1} parent=1 // pred_check
      %p41 = pneg %p40
    $region19: #{tpu_custom_call.1} parent=1 // pred_check_branch
      %43 = sbr.rel (%p41) target = $region21
    $region20: #{tpu_custom_call.1} parent=1 // pred_region
      %44 = vst [vmem:[#allocation2] sm:$0xff] 0.0
      %45 = vst [vmem:[#allocation2 + $0x8] sm:$0xff] 0.0
      %46 = vst [vmem:[#allocation2 + $0x10] sm:$0xff] 0.0
      %47 = vst [vmem:[#allocation2 + $0x18] sm:$0xff] 0.0
    $region21: #{tpu_custom_call.1} parent=1 // pred_fallthru
      _
    %v48 = vld [vmem:[#allocation2] sm:$0xff]
    %v49 = vld [vmem:[#allocation2 + $0x8] sm:$0xff]
    %v50 = vld [vmem:[#allocation2 + $0x10] sm:$0xff]
    %v51 = vld [vmem:[#allocation2 + $0x18] sm:$0xff]
    %v52 = vld [vmem:[#allocation3] sm:$0xff]
    %v53 = vld [vmem:[#allocation3 + $0x8] sm:$0xff]
    %v54 = vld [vmem:[#allocation3 + $0x10] sm:$0xff]
    %v55 = vld [vmem:[#allocation3 + $0x18] sm:$0xff]
    %v56 = vld [vmem:[#allocation6] sm:$0xff]
    %v57 = vld [vmem:[#allocation6 + $0x8] sm:$0xff]
    %v58 = vld [vmem:[#allocation6 + $0x10] sm:$0xff]
    %v59 = vld [vmem:[#allocation6 + $0x18] sm:$0xff]
    %v60 = vld [vmem:[#allocation6 + $0x20] sm:$0xff]
    %v61 = vld [vmem:[#allocation6 + $0x28] sm:$0xff]
    %v62 = vld [vmem:[#allocation6 + $0x30] sm:$0xff]
    %v63 = vld [vmem:[#allocation6 + $0x38] sm:$0xff]
    %vm64 = vcmask 523264
    %v66 = vsel %vm64, %v52, 0
    %v69 = vsel %vm64, %v53, 0
    %v72 = vsel %vm64, %v54, 0
    %v75 = vsel %vm64, %v55, 0
    %77 = vmatprep.subr.mxu0 0.0
    %78 = vmatpush1.msra.mxu0 %v56
    %79 = vmatprep.subr.mxu0 0.0
    %80 = vmatpush1.msra.mxu0 %v57
    %81 = vmatprep.subr.mxu0 0.0
    %82 = vmatpush1.msra.mxu0 %v58
    %83 = vmatprep.subr.mxu0 0.0
    %84 = vmatpush1.msra.mxu0 %v59
    %85 = vmatprep.subr.mxu0 0.0
    %86 = vmatpush1.msra.mxu0 %v60
    %87 = vmatprep.subr.mxu0 0.0
    %88 = vmatpush1.msra.mxu0 %v61
    %89 = vmatprep.subr.mxu0 0.0
    %90 = vmatpush1.msra.mxu0 %v62
    %91 = vmatprep.subr.mxu0 0.0
    %92 = vmatpush1.msra.mxu0 %v63
    %93 = vmatprep.subr.mxu0 0.0
    %94 = vmatpush1.msra.mxu0 0.0
    %95 = vmatprep.subr.mxu0 0.0
    %96 = vmatpush1.msra.mxu0 0.0
    %97 = vmatprep.subr.mxu0 0.0
    %98 = vmatpush1.msra.mxu0 0.0
    %99 = vmatprep.subr.mxu0 0.0
    %100 = vmatpush1.msra.mxu0 0.0
    %101 = vmatprep.subr.mxu0 0.0
    %102 = vmatpush1.msra.mxu0 0.0
    %103 = vmatprep.subr.mxu0 0.0
    %104 = vmatpush1.msra.mxu0 0.0
    %105 = vmatprep.subr.mxu0 0.0
    %106 = vmatpush1.msra.mxu0 0.0
    %107 = vmatprep.subr.mxu0 0.0
    %108 = vmatpush1.msra.mxu0 0.0
    %109 = vmatprep.subr.mxu0 0.0
    %110 = vmatpush1.msra.mxu0 0.0
    %111 = vmatprep.subr.mxu0 0.0
    %112 = vmatpush1.msra.mxu0 0.0
    %113 = vmatprep.subr.mxu0 0.0
    %114 = vmatpush1.msra.mxu0 0.0
    %115 = vmatprep.subr.mxu0 0.0
    %116 = vmatpush1.msra.mxu0 0.0
    %117 = vmatprep.subr.mxu0 0.0
    %118 = vmatpush1.msra.mxu0 0.0
    %119 = vmatprep.subr.mxu0 0.0
    %120 = vmatpush1.msra.mxu0 0.0
    %121 = vmatprep.subr.mxu0 0.0
    %122 = vmatpush1.msra.mxu0 0.0
    %123 = vmatprep.subr.mxu0 0.0
    %124 = vmatpush1.msra.mxu0 0.0
    %125 = vmatprep.subr.mxu0 0.0
    %126 = vmatpush1.msra.mxu0 0.0
    %127 = vmatprep.subr.mxu0 0.0
    %128 = vmatpush1.msra.mxu0 0.0
    %129 = vmatprep.subr.mxu0 0.0
    %130 = vmatpush1.msra.mxu0 0.0
    %131 = vmatprep.subr.mxu0 0.0
    %132 = vmatpush1.msra.mxu0 0.0
    %133 = vmatprep.subr.mxu0 0.0
    %134 = vmatpush1.msra.mxu0 0.0
    %135 = vmatprep.subr.mxu0 0.0
    %136 = vmatpush1.msra.mxu0 0.0
    %137 = vmatprep.subr.mxu0 0.0
    %138 = vmatpush1.msra.mxu0 0.0
    %139 = vmatprep.subr.mxu0 0.0
    %140 = vmatpush1.msra.mxu0 0.0
    %141 = vmatprep.mubr.f32.mxu0 0.0
    %142 = vmatmul.mubr.f32.gmra.mrb[0].mxu0 %v66
    %v143 = vpop.f32.mrb[0].mxu0
    %v144 = vadd.f32 0.0, %v143
    %v145 = vpop.f32.mrb[0].mxu0
    %146 = vmatprep.mubr.f32.mxu0 0.0
    %147 = vmatmul.mubr.f32.gmra.mrb[0].mxu0 %v69
    %v148 = vpop.f32.mrb[0].mxu0
    %v149 = vadd.f32 0.0, %v148
    %v150 = vpop.f32.mrb[0].mxu0
    %151 = vmatprep.mubr.f32.mxu0 0.0
    %152 = vmatmul.mubr.f32.gmra.mrb[0].mxu0 %v72
    %v153 = vpop.f32.mrb[0].mxu0
    %v154 = vadd.f32 0.0, %v153
    %v155 = vpop.f32.mrb[0].mxu0
    %156 = vmatprep.mubr.f32.mxu0 0.0
    %157 = vmatmul.mubr.f32.gmra.mrb[0].mxu0 %v75
    %v158 = vpop.f32.mrb[0].mxu0
    %v159 = vadd.f32 0.0, %v158
    %v160 = vpop.f32.mrb[0].mxu0
    %161 = vdwg.mxu0
    %v162 = vadd.f32 %v48, %v144
    %v163 = vadd.f32 %v49, %v149
    %v164 = vadd.f32 %v50, %v154
    %v165 = vadd.f32 %v51, %v159
    %166 = vst [vmem:[#allocation2] sm:$0xff] %v162
    %167 = vst [vmem:[#allocation2 + $0x8] sm:$0xff] %v163
    %168 = vst [vmem:[#allocation2 + $0x10] sm:$0xff] %v164
    %169 = vst [vmem:[#allocation2 + $0x18] sm:$0xff] %v165
    // Predicated region
    $region22: #{tpu_custom_call.1} parent=1 // pred_check
      %p170 = pneg %p40
    $region23: #{tpu_custom_call.1} parent=1 // pred_check_branch
      %172 = sbr.rel (%p170) target = $region25
    $region24: #{tpu_custom_call.1} parent=1 // pred_region
      %v173 = vld [vmem:[#allocation2] sm:$0xff]
      %v174 = vld [vmem:[#allocation2 + $0x8] sm:$0xff]
      %v175 = vld [vmem:[#allocation2 + $0x10] sm:$0xff]
      %v176 = vld [vmem:[#allocation2 + $0x18] sm:$0xff]
      %177 = vst [vmem:[#allocation8] sm:$0xff] %v173
      %178 = vst [vmem:[#allocation8 + $0x8] sm:$0xff] %v174
      %179 = vst [vmem:[#allocation8 + $0x10] sm:$0xff] %v175
      %180 = vst [vmem:[#allocation8 + $0x18] sm:$0xff] %v176
    $region25: #{tpu_custom_call.1} parent=1 // pred_fallthru
      _
    // Predicated region
    $region26: #{tpu_custom_call.1} parent=1 // pred_check
      _
    $region27: #{tpu_custom_call.1} parent=1 // pred_check_branch
      %182 = sbr.rel (0) target = $region29
    $region28: #{tpu_custom_call.1} parent=1 // pred_region
      %s184 = ssub.s32 512, 512
      %185 = vsyncadd [#allocation5], %s184
      %s186 = sshll.u32 [#allocation8], 4
      %s187 = int_to_ptr.vmem [resolvable:$true] %s186
      %192 = dma.vmem_to_hbm [thread:$0]  %s187, 512, %s2, [#allocation5], 128, 128, 8
    $region29: #{tpu_custom_call.1} parent=1 // pred_fallthru
      _
    // Predicated region
    $region30: #{tpu_custom_call.1} parent=1 // pred_check
      _
    $region31: #{tpu_custom_call.1} parent=1 // pred_check_branch
      %194 = sbr.rel (0) target = $region33
    $region32: #{tpu_custom_call.1} parent=1 // pred_region
      %195 = dma.done [#allocation5], 512
    $region33: #{tpu_custom_call.1} parent=1 // pred_fallthru
      _
    %196 = vsyncpa [#allocation4], 1
    %197 = vsyncpa [#allocation7], 1
    %198 = vsyncpa [#allocation5], 1

</llo_original>
